<compile_context>
chip_gen: v7x
topology: tpu7x:2x2x1
jax: 0.10.0
libtpu: 0.0.40
codegen_flags: <defaults>
</compile_context>

<pallas_src>
import jax
import jax.numpy as jnp
from jax.experimental import pallas as pl
from jax.experimental.pallas import tpu as pltpu


def _pp_kernel(enc_ref, pos_ref, wv_ref, we_ref, g_ref, attn_ref):
    # enc_ref : (Bt, P, d)  model dtype
    # pos_ref : (P, d)      f32 (w0/emb term with wv bias folded in)
    # wv_ref  : (d, d)      model dtype   (grid-constant)
    # we_ref  : (Npad, d)   model dtype   (grid-constant, zero-padded rows)
    # g_ref   : (Bt, Npad, d)
    # attn_ref: (Bt, Npad, P)
    bt, p, d = enc_ref.shape
    n_pad = we_ref.shape[0]

    enc = enc_ref[...]                                          # (Bt, P, d)
    # bf16 activations on bf16 models (halves EUP/VPU width for the tanh on
    # v6e/v7x); f32 otherwise.  (On v5e a bf16 model round-trips via f32.)
    act_dtype = enc.dtype if enc.dtype == jnp.bfloat16 else jnp.float32

    # hv = enc @ Wv^T : collapse batch so Bt*P rows stream against the
    # grid-constant Wv; (1,1) contraction — no transpose ahead of the MXU.
    hv = jax.lax.dot_general(
        enc.reshape(bt * p, d), wv_ref[...],
        dimension_numbers=(((1,), (1,)), ((), ())),
        preferred_element_type=jnp.float32,
    ).reshape(bt, p, d)                                         # f32

    # pos is batch-independent (f32, biases folded in); tanh on the EUP.
    h = jnp.tanh((hv + pos_ref[...][None]).astype(act_dtype))   # (Bt, P, d)

    # scores[b*P + p, n] = sum_d h[b, p, d] * We[n, d]
    # We (grid-constant) is the stationary MXU operand; Bt*P rows of h stream.
    s = jax.lax.dot_general(
        h.reshape(bt * p, d).astype(we_ref.dtype), we_ref[...],
        dimension_numbers=(((1,), (1,)), ((), ())),
        preferred_element_type=jnp.float32,
    ).reshape(bt, p, n_pad)
    # NOTE: we.bias is omitted — constant along the softmax axis (P), cancels.

    # Small XLU transpose so the softmax reduction runs along the lane axis and
    # attn is produced directly in its final (N, P) lane-dense layout.
    s = jnp.transpose(s, (0, 2, 1))                             # (Bt, Npad, P) f32

    # Numerically-stable softmax over n_position (lane axis).
    m = jnp.max(s, axis=-1, keepdims=True)
    e = jnp.exp(s - m)
    denom = jnp.sum(e, axis=-1, keepdims=True)                  # (Bt, Npad, 1)
    attn = e * pl.reciprocal(denom)                             # exact; tiny vector

    attn_lp = attn.astype(attn_ref.dtype)                       # single cast, reused
    attn_ref[...] = attn_lp

    # g = attn @ enc : (Bt, Npad, P) x (Bt, P, d) -> (Bt, Npad, d)  (MXU, batched)
    g = jax.lax.dot_general(
        attn_lp, enc,
        dimension_numbers=(((2,), (1,)), ((0,), (0,))),
        preferred_element_type=jnp.float32,
    )
    g_ref[...] = g.astype(g_ref.dtype)


def pp_layer_forward(enc_output, emb, w0_w, w0_b, wv_w, wv_b, we_w, we_b,
                     *, block_b=None):
    """Pallas TPU implementation of PP_layer.forward.

    enc_output: (B, n_position, n_dim)
    emb:  f0_embedding.weight (N_max_character, n_dim)
    w0_w: (n_position, N_max_character), w0_b: (n_position,)
    wv_w: (n_dim, n_dim),                wv_b: (n_dim,)
    we_w: (N_max_character, n_dim),      we_b: (N_max_character,)
    Returns (g_output (B, N, n_dim), attn (B, N, n_position)).
    """
    B, P, d = enc_output.shape
    N, d_e = emb.shape
    assert d_e == d
    assert w0_w.shape == (P, N) and w0_b.shape == (P,)
    assert wv_w.shape == (d, d) and wv_b.shape == (d,)
    assert we_w.shape == (N, d) and we_b.shape == (N,)
    # we_b is constant along the softmax reduction axis (n_position) -> exact
    # no-op on both outputs; dropped.
    del we_b

    out_dtype = enc_output.dtype
    isz = jnp.dtype(out_dtype).itemsize

    # Batch-independent precompute: f0_embedding(arange(N)) is just the table.
    # pos[p, e] = sum_n w0_w[p, n] * emb[n, e] + w0_b[p]; wv bias folded in.
    pos = (
        jnp.dot(w0_w.astype(jnp.float32), emb.astype(jnp.float32),
                preferred_element_type=jnp.float32)
        + w0_b.astype(jnp.float32)[:, None]
        + wv_b.astype(jnp.float32)[None, :]
    )                                                           # (P, d) f32

    # Pad the character axis to a sublane-aligned size (8 f32 / 16 bf16) with
    # zero rows in We — padded rows produce harmless uniform-attn rows that are
    # sliced off below.
    sub = max(8, 32 // isz)
    n_pad = pl.cdiv(N, sub) * sub
    we_p = we_w if n_pad == N else jnp.pad(we_w, ((0, n_pad - N), (0, 0)))

    # Batch blocking: amortize per-step pipeline overhead and feed the MXU a
    # tall (Bt*P)-row streaming dimension.  VMEM check at module defaults
    # (P=256, d=512, f32, Bt=4): 2x 2 MiB enc buffers + ~1.6 MiB constants +
    # outputs/intermediates — well inside the 16 MiB default scoped VMEM on
    # v5e and the 32 MiB scoped budget on v7x.
    if block_b is None:
        block_b = 8 if isz <= 2 else 4
    block_b = max(1, min(block_b, B))
    if B >= 2:
        # keep >= 2 grid steps so v7x's two TensorCores share the batch axis
        block_b = min(block_b, pl.cdiv(B, 2))
    b_pad = pl.cdiv(B, block_b) * block_b
    enc_p = enc_output if b_pad == B else jnp.pad(
        enc_output, ((0, b_pad - B), (0, 0), (0, 0)))

    grid = (b_pad // block_b,)

    # enc / outputs move per step; pos / Wv / We are grid-constant and
    # single-buffered (fetched once, no second pipeline buffer reserved).
    enc_spec = pl.BlockSpec((block_b, P, d), lambda b: (b, 0, 0))
    pos_spec = pl.BlockSpec((P, d), lambda b: (0, 0),
                            pipeline_mode=pl.Buffered(1))
    wv_spec = pl.BlockSpec((d, d), lambda b: (0, 0),
                           pipeline_mode=pl.Buffered(1))
    we_spec = pl.BlockSpec((n_pad, d), lambda b: (0, 0),
                           pipeline_mode=pl.Buffered(1))
    g_spec = pl.BlockSpec((block_b, n_pad, d), lambda b: (b, 0, 0))
    attn_spec = pl.BlockSpec((block_b, n_pad, P), lambda b: (b, 0, 0))
    # TODO(synk): if a trace ever shows exposed enc DMA at large Bt, bump
    # enc_spec to pipeline_mode=pl.Buffered(3).

    out_shapes = (
        jax.ShapeDtypeStruct((b_pad, n_pad, d), out_dtype),     # g_output
        jax.ShapeDtypeStruct((b_pad, n_pad, P), out_dtype),     # attn
    )

    cost = pl.CostEstimate(
        flops=2 * b_pad * (P * d * d + 2 * n_pad * P * d),
        transcendentals=b_pad * (P * d + n_pad * P),
        bytes_accessed=(b_pad * P * d * isz                     # enc read
                        + P * d * 4
                        + d * d * jnp.dtype(wv_w.dtype).itemsize
                        + n_pad * d * jnp.dtype(we_w.dtype).itemsize
                        + b_pad * n_pad * d * isz
                        + b_pad * n_pad * P * isz),
    )

    g, attn = pl.pallas_call(
        _pp_kernel,
        out_shape=out_shapes,
        grid_spec=pltpu.PrefetchScalarGridSpec(
            num_scalar_prefetch=0,
            grid=grid,
            in_specs=[enc_spec, pos_spec, wv_spec, we_spec],
            out_specs=[g_spec, attn_spec],
        ),
        compiler_params=pltpu.CompilerParams(
            dimension_semantics=("parallel",),
        ),
        cost_estimate=cost,
    )(enc_p, pos, wv_w, we_p)

    if b_pad != B or n_pad != N:
        g = g[:B, :N]
        attn = attn[:B, :N]
    return g, attn


def _reference(enc, emb, w0_w, w0_b, wv_w, wv_b, we_w, we_b):
    """Pure-JAX mirror of the torch PP_layer.forward (we_b included)."""
    B, P, d = enc.shape
    N = emb.shape[0]
    reading = jnp.broadcast_to(emb[None], (B, N, d))                      # (B, N, d)
    t = jnp.einsum("bdn,pn->bdp", jnp.transpose(reading, (0, 2, 1)), w0_w) + w0_b
    t = jnp.transpose(t, (0, 2, 1))                                       # (B, P, d)
    h = jnp.tanh(t + jnp.einsum("bpd,ed->bpe", enc, wv_w) + wv_b)         # (B, P, d)
    s = jnp.einsum("bpd,nd->bpn", h, we_w) + we_b                         # (B, P, N)
    s = jnp.transpose(s, (0, 2, 1))                                       # (B, N, P)
    attn = jax.nn.softmax(s, axis=2)
    g = jnp.einsum("bnp,bpd->bnd", attn, enc)                             # (B, N, d)
    return g, attn


def _make_inputs(key, B, n_dim, N_max, n_pos):
    ks = jax.random.split(key, 8)
    enc = jax.random.normal(ks[0], (B, n_pos, n_dim), dtype=jnp.float32)
    emb = jax.random.normal(ks[1], (N_max, n_dim), dtype=jnp.float32)
    w0_w = jax.random.normal(ks[2], (n_pos, N_max), dtype=jnp.float32) * 0.2
    w0_b = jax.random.normal(ks[3], (n_pos,), dtype=jnp.float32) * 0.1
    wv_w = jax.random.normal(ks[4], (n_dim, n_dim), dtype=jnp.float32) * 0.2
    wv_b = jax.random.normal(ks[5], (n_dim,), dtype=jnp.float32) * 0.1
    we_w = jax.random.normal(ks[6], (N_max, n_dim), dtype=jnp.float32) * 0.2
    we_b = jax.random.normal(ks[7], (N_max,), dtype=jnp.float32) * 0.1
    return enc, emb, w0_w, w0_b, wv_w, wv_b, we_w, we_b


if __name__ == "__main__":
    key = jax.random.PRNGKey(0)
    k1, k2 = jax.random.split(key)

    # Case 1: small shapes consistent with the module (B=2, n_dim=32,
    # N_max_character=8, n_position=16).  Aligned N and B.
    args = _make_inputs(k1, B=2, n_dim=32, N_max=8, n_pos=16)
    g, attn = pp_layer_forward(*args)
    g = jax.block_until_ready(g)
    attn = jax.block_until_ready(attn)
    g_ref, attn_ref = _reference(*args)
    assert g.shape == (2, 8, 32) and attn.shape == (2, 8, 16)
    assert jnp.allclose(attn, attn_ref, atol=2e-3, rtol=2e-3)
    assert jnp.allclose(g, g_ref, atol=2e-3, rtol=2e-3)

    # Case 2: ragged shapes (B=3, N=5) to exercise the batch- and N-padding
    # paths (padded rows are computed and sliced off).
    args2 = _make_inputs(k2, B=3, n_dim=32, N_max=5, n_pos=16)
    g2, attn2 = pp_layer_forward(*args2)
    g2 = jax.block_until_ready(g2)
    attn2 = jax.block_until_ready(attn2)
    g2_ref, attn2_ref = _reference(*args2)
    assert g2.shape == (3, 5, 32) and attn2.shape == (3, 5, 16)
    assert jnp.allclose(attn2, attn2_ref, atol=2e-3, rtol=2e-3)
    assert jnp.allclose(g2, g2_ref, atol=2e-3, rtol=2e-3)

    print("KERNEL_OK")
</pallas_src>

<mosaic_0001>
module attributes {stable_mosaic.version = 11 : i64} {
  func.func @_pp_kernel(%arg0: i32, %arg1: memref<1x16x32xf32, #tpu.memory_space<vmem>>, %arg2: memref<16x32xf32, #tpu.memory_space<vmem>>, %arg3: memref<32x32xf32, #tpu.memory_space<vmem>>, %arg4: memref<8x32xf32, #tpu.memory_space<vmem>>, %arg5: memref<1x8x32xf32, #tpu.memory_space<vmem>>, %arg6: memref<1x8x16xf32, #tpu.memory_space<vmem>>) attributes {dimension_semantics = [#tpu.dimension_semantics<parallel>], iteration_bounds = array<i64: 2>, scalar_prefetch = 0 : i64, scratch_operands = 0 : i64, tpu.core_type = #tpu.core_type<tc>, window_params = [{transform_indices = @transform_0, window_bounds = array<i64: 1, 16, 32>}, {pipeline_mode = #tpu.pipeline_mode<synchronous>, transform_indices = @transform_1, window_bounds = array<i64: 16, 32>}, {pipeline_mode = #tpu.pipeline_mode<synchronous>, transform_indices = @transform_2, window_bounds = array<i64: 32, 32>}, {pipeline_mode = #tpu.pipeline_mode<synchronous>, transform_indices = @transform_3, window_bounds = array<i64: 8, 32>}, {transform_indices = @transform_4, window_bounds = array<i64: 1, 8, 32>}, {transform_indices = @transform_5, window_bounds = array<i64: 1, 8, 16>}]} {
    %c0 = arith.constant 0 : index
    %c0_0 = arith.constant 0 : index
    %c0_1 = arith.constant 0 : index
    %0 = vector.load %arg1[%c0, %c0_0, %c0_1] : memref<1x16x32xf32, #tpu.memory_space<vmem>>, vector<1x16x32xf32>
    %1 = vector.shape_cast %0 : vector<1x16x32xf32> to vector<16x32xf32>
    %c0_2 = arith.constant 0 : index
    %c0_3 = arith.constant 0 : index
    %2 = vector.load %arg3[%c0_2, %c0_3] : memref<32x32xf32, #tpu.memory_space<vmem>>, vector<32x32xf32>
    %cst = arith.constant dense<0.000000e+00> : vector<16x32xf32>
    %3 = tpu.matmul %1, %2, %cst {dimension_numbers = #tpu.dot_dimension_numbers<[1], [1], [0], [0], [0, 0, 1, 0], [], []>} : vector<16x32xf32>, vector<32x32xf32>, vector<16x32xf32> -> vector<16x32xf32>
    %4 = vector.shape_cast %3 : vector<16x32xf32> to vector<1x16x32xf32>
    %c0_4 = arith.constant 0 : index
    %c0_5 = arith.constant 0 : index
    %5 = vector.load %arg2[%c0_4, %c0_5] : memref<16x32xf32, #tpu.memory_space<vmem>>, vector<16x32xf32>
    %6 = vector.shape_cast %5 : vector<16x32xf32> to vector<1x16x32xf32>
    %7 = arith.addf %4, %6 : vector<1x16x32xf32>
    %8 = math.tanh %7 : vector<1x16x32xf32>
    %9 = vector.shape_cast %8 : vector<1x16x32xf32> to vector<16x32xf32>
    %c0_6 = arith.constant 0 : index
    %c0_7 = arith.constant 0 : index
    %10 = vector.load %arg4[%c0_6, %c0_7] : memref<8x32xf32, #tpu.memory_space<vmem>>, vector<8x32xf32>
    %cst_8 = arith.constant dense<0.000000e+00> : vector<16x8xf32>
    %11 = tpu.matmul %9, %10, %cst_8 {dimension_numbers = #tpu.dot_dimension_numbers<[1], [1], [0], [0], [0, 0, 1, 0], [], []>} : vector<16x32xf32>, vector<8x32xf32>, vector<16x8xf32> -> vector<16x8xf32>
    %12 = vector.shape_cast %11 : vector<16x8xf32> to vector<1x16x8xf32>
    %13 = tpu.transpose %12, [0, 2, 1] : vector<1x16x8xf32> -> vector<1x8x16xf32>
    %cst_9 = arith.constant dense<0xFF800000> : vector<1x8xf32>
    %14 = vector.multi_reduction <maximumf>, %13, %cst_9 [2] : vector<1x8x16xf32> to vector<1x8xf32>
    %15 = vector.shape_cast %14 : vector<1x8xf32> to vector<1x8x1xf32>
    %16 = vector.broadcast %15 : vector<1x8x1xf32> to vector<1x8x16xf32>
    %17 = arith.subf %13, %16 : vector<1x8x16xf32>
    %18 = math.exp %17 : vector<1x8x16xf32>
    %cst_10 = arith.constant dense<0.000000e+00> : vector<1x8xf32>
    %19 = vector.multi_reduction <add>, %18, %cst_10 [2] : vector<1x8x16xf32> to vector<1x8xf32>
    %20 = vector.shape_cast %19 : vector<1x8xf32> to vector<1x8x1xf32>
    %21 = tpu.reciprocal %20 : vector<1x8x1xf32> -> vector<1x8x1xf32>
    %22 = vector.broadcast %21 : vector<1x8x1xf32> to vector<1x8x16xf32>
    %23 = arith.mulf %18, %22 : vector<1x8x16xf32>
    %c0_11 = arith.constant 0 : index
    %c0_12 = arith.constant 0 : index
    %c0_13 = arith.constant 0 : index
    %24 = vector.load %arg6[%c0_11, %c0_12, %c0_13] : memref<1x8x16xf32, #tpu.memory_space<vmem>>, vector<1x8x16xf32>
    tpu.vector_store %arg6[%c0_11, %c0_12, %c0_13], %23 {strides = array<i32>} : memref<1x8x16xf32, #tpu.memory_space<vmem>>, vector<1x8x16xf32>,
    %cst_14 = arith.constant dense<0.000000e+00> : vector<1x8x32xf32>
    %25 = tpu.matmul %23, %0, %cst_14 {dimension_numbers = #tpu.dot_dimension_numbers<[2], [1], [1], [2], [0, 0, 0, 1, 1, 2], [0], [0]>} : vector<1x8x16xf32>, vector<1x16x32xf32>, vector<1x8x32xf32> -> vector<1x8x32xf32>
    %c0_15 = arith.constant 0 : index
    %c0_16 = arith.constant 0 : index
    %c0_17 = arith.constant 0 : index
    %26 = vector.load %arg5[%c0_15, %c0_16, %c0_17] : memref<1x8x32xf32, #tpu.memory_space<vmem>>, vector<1x8x32xf32>
    tpu.vector_store %arg5[%c0_15, %c0_16, %c0_17], %25 {strides = array<i32>} : memref<1x8x32xf32, #tpu.memory_space<vmem>>, vector<1x8x32xf32>,
    return
  }
  func.func @transform_0(%arg0: i32) -> (i32, i32, i32) {
    %c0_i32 = arith.constant 0 : i32
    %c0_i32_0 = arith.constant 0 : i32
    %c0_i32_1 = arith.constant 0 : i32
    return %arg0, %c0_i32, %c0_i32_0 : i32, i32, i32
  }
  func.func @transform_1(%arg0: i32) -> (i32, i32) {
    %c0_i32 = arith.constant 0 : i32
    %c0_i32_0 = arith.constant 0 : i32
    %c0_i32_1 = arith.constant 0 : i32
    return %c0_i32, %c0_i32_0 : i32, i32
  }
  func.func @transform_2(%arg0: i32) -> (i32, i32) {
    %c0_i32 = arith.constant 0 : i32
    %c0_i32_0 = arith.constant 0 : i32
    %c0_i32_1 = arith.constant 0 : i32
    return %c0_i32, %c0_i32_0 : i32, i32
  }
  func.func @transform_3(%arg0: i32) -> (i32, i32) {
    %c0_i32 = arith.constant 0 : i32
    %c0_i32_0 = arith.constant 0 : i32
    %c0_i32_1 = arith.constant 0 : i32
    return %c0_i32, %c0_i32_0 : i32, i32
  }
  func.func @transform_4(%arg0: i32) -> (i32, i32, i32) {
    %c0_i32 = arith.constant 0 : i32
    %c0_i32_0 = arith.constant 0 : i32
    %c0_i32_1 = arith.constant 0 : i32
    return %arg0, %c0_i32, %c0_i32_0 : i32, i32, i32
  }
  func.func @transform_5(%arg0: i32) -> (i32, i32, i32) {
    %c0_i32 = arith.constant 0 : i32
    %c0_i32_0 = arith.constant 0 : i32
    %c0_i32_1 = arith.constant 0 : i32
    return %arg0, %c0_i32, %c0_i32_0 : i32, i32, i32
  }
}

</mosaic_0001>

<llo_original>
// kernel: tpu_custom_call.1
$region0: #{tpu_custom_call.1}
  #allocation0 [shape = 'u32[]', space=smem, size = 0x4, offset = 0x4, fixed_abs, tag = 'smem constant byte address 0x4 - core index']
  #allocation1 [shape = 'u32[144,128]{1,0:T(1,128)}', space=vmem, size = 0x12000, scoped, tag = 'internal scratch']
  %s0 = inlined_call_operand.hbm [shape: f32[2,16,32], index: 0, kind: input, shape index: {}]
  %s1 = inlined_call_operand.hbm [shape: f32[16,32], index: 1, kind: input, shape index: {}]
  %s2 = inlined_call_operand.hbm [shape: f32[32,32], index: 2, kind: input, shape index: {}]
  %s3 = inlined_call_operand.vmem [shape: f32[8,32], index: 3, kind: input, shape index: {}]
  %s4 = inlined_call_operand.hbm [shape: f32[2,8,32], index: 4, kind: output, shape index: {0}]
  %s5 = inlined_call_operand.hbm [shape: f32[2,8,16], index: 5, kind: output, shape index: {1}]
  %6 = xla_tuple %s4, %s5
  %s7 = sld [smem:[#allocation0]]
  $region69: #{tpu_custom_call.1} parent=0
    _
  %s9 = ssub.s32 1, %s7
  %s10 = scalar_select 0, %s9, %s7
  $region1: #{tpu_custom_call.1} parent=0
    #allocation2 [shape = 'u8[16384]{0}', space=vmem, size = 0x4000, scoped, tag = 'input window, operand 0']
    #allocation3 [shape = 's32[2]{0}', space=sflag, size = 0x8, scoped, tag = 'scoped memory for tpu_custom_call.1']
    #allocation4 [shape = 's32[2]{0}', space=sflag, size = 0x8, scoped, tag = 'scoped memory for tpu_custom_call.1']
    #allocation5 [shape = 'u8[8192]{0}', space=vmem, size = 0x2000, scoped, tag = 'input window, operand 1, single buffered']
    #allocation6 [shape = 's32[1]{0}', space=sflag, size = 0x4, scoped, tag = 'scoped memory for tpu_custom_call.1']
    #allocation7 [shape = 'u8[16384]{0}', space=vmem, size = 0x4000, scoped, tag = 'input window, operand 2, single buffered']
    #allocation8 [shape = 'u8[8192]{0}', space=vmem, size = 0x2000, scoped, tag = 'output window, operand 0']
    #allocation9 [shape = 'u8[8192]{0}', space=vmem, size = 0x2000, scoped, tag = 'output window, operand 1']
    #allocation10 [shape = 's32[2]{0}', space=sflag, size = 0x8, scoped, tag = 'scoped memory for tpu_custom_call.1']
    %11 = vsyncpa [#allocation3], 0
    %s12 = scalar_lea.sflag [#allocation3], 1
    %13 = vsyncpa %s12, 0
    %14 = vsyncpa [#allocation6], 0
    %15 = vsyncpa [#allocation4], 0
    %s16 = scalar_lea.sflag [#allocation4], 1
    %17 = vsyncpa %s16, 0
    %18 = vsyncpa [#allocation10], 0
    %s19 = scalar_lea.sflag [#allocation10], 1
    %20 = vsyncpa %s19, 0
    loop: start=0, step=1, limit=4
    $region2: #{tpu_custom_call.1} parent=1 // loop_pre_header
      _
    $region3: #{tpu_custom_call.1} parent=1 // loop_header
      %s22 = sphi 0, %s26
      %p23 = scmp.ge.s32.totalorder %s22, 4
      %s32 = sphi 0, %s34
      %s35 = sphi 0, %s32
      %s36 = sphi 0, %s35
      %s52 = sphi 0, %s36
      %s56 = sphi 0, %s56
      %s58 = sphi 0, %s56
      %s59 = sphi 0, %s58
      %s73 = sphi 0, %s59
      %s77 = sphi 0, %s77
      %s79 = sphi 0, %s77
      %s80 = sphi 0, %s79
      %s94 = sphi 0, %s80
      %s98 = sphi 0, %s98
      %s100 = sphi 0, %s98
      %s101 = sphi 0, %s100
      %s115 = sphi 0, %s101
      %s121 = sphi 0, %s123
      %s124 = sphi 0, %s121
      %s125 = sphi 0, %s124
      %s141 = sphi 0, %s125
      %s147 = sphi 0, %s149
      %s150 = sphi 0, %s147
      %s151 = sphi 0, %s150
      %s167 = sphi 0, %s151
    $region4: #{tpu_custom_call.1} parent=1 // loop_header_branch
      %25 = sbr.rel (%p23) target = $region8
    $region5: #{tpu_custom_call.1} parent=1 // loop_body
      %s27 = ssub.s32 %s22, 1
      %s28 = ssub.s32 %s22, 2
      %s29 = sadd.s32 %s22, 1
      %s30 = ssub.s32 %s22, %s29
      %p31 = scmp.eq.s32.totalorder %s30, 0
      %s33 = sadd.s32 %s32, 1
      %s34 = scalar_select %p31, %s32, %s33
      %p37 = pneg %p31
      %p38 = scmp.eq.s32.totalorder %s22, 1
      %p39 = por %p37, %p38
      %p40 = scmp.ne.s32.totalorder %s32, %s35
      %p41 = scmp.eq.s32.totalorder %s22, 0
      %p42 = por %p40, %p41
      %p43 = scmp.ne.s32.totalorder %s32, %s35
      %p44 = scmp.eq.s32.totalorder %s27, 1
      %p45 = por %p43, %p44
      %p46 = scmp.ne.s32.totalorder %s35, %s36
      %p47 = scmp.eq.s32.totalorder %s27, 0
      %p48 = por %p46, %p47
      %p49 = scmp.ne.s32.totalorder %s35, %s36
      %p50 = scmp.eq.s32.totalorder %s28, 1
      %p51 = por %p49, %p50
      %p53 = scmp.ne.s32.totalorder %s36, %s52
      %p54 = scmp.eq.s32.totalorder %s28, 0
      %p55 = por %p53, %p54
      %s57 = sadd.s32 %s56, 1
      %p60 = scmp.eq.s32.totalorder %s22, 1
      %p61 = scmp.ne.s32.totalorder %s56, %s58
      %p62 = scmp.eq.s32.totalorder %s22, 0
      %p63 = por %p61, %p62
      %p64 = scmp.ne.s32.totalorder %s56, %s58
      %p65 = scmp.eq.s32.totalorder %s27, 1
      %p66 = por %p64, %p65
      %p67 = scmp.ne.s32.totalorder %s58, %s59
      %p68 = scmp.eq.s32.totalorder %s27, 0
      %p69 = por %p67, %p68
      %p70 = scmp.ne.s32.totalorder %s58, %s59
      %p71 = scmp.eq.s32.totalorder %s28, 1
      %p72 = por %p70, %p71
      %p74 = scmp.ne.s32.totalorder %s59, %s73
      %p75 = scmp.eq.s32.totalorder %s28, 0
      %p76 = por %p74, %p75
      %s78 = sadd.s32 %s77, 1
      %p81 = scmp.eq.s32.totalorder %s22, 1
      %p82 = scmp.ne.s32.totalorder %s77, %s79
      %p83 = scmp.eq.s32.totalorder %s22, 0
      %p84 = por %p82, %p83
      %p85 = scmp.ne.s32.totalorder %s77, %s79
      %p86 = scmp.eq.s32.totalorder %s27, 1
      %p87 = por %p85, %p86
      %p88 = scmp.ne.s32.totalorder %s79, %s80
      %p89 = scmp.eq.s32.totalorder %s27, 0
      %p90 = por %p88, %p89
      %p91 = scmp.ne.s32.totalorder %s79, %s80
      %p92 = scmp.eq.s32.totalorder %s28, 1
      %p93 = por %p91, %p92
      %p95 = scmp.ne.s32.totalorder %s80, %s94
      %p96 = scmp.eq.s32.totalorder %s28, 0
      %p97 = por %p95, %p96
      %s99 = sadd.s32 %s98, 1
      %p102 = scmp.eq.s32.totalorder %s22, 1
      %p103 = scmp.ne.s32.totalorder %s98, %s100
      %p104 = scmp.eq.s32.totalorder %s22, 0
      %p105 = por %p103, %p104
      %p106 = scmp.ne.s32.totalorder %s98, %s100
      %p107 = scmp.eq.s32.totalorder %s27, 1
      %p108 = por %p106, %p107
      %p109 = scmp.ne.s32.totalorder %s100, %s101
      %p110 = scmp.eq.s32.totalorder %s27, 0
      %p111 = por %p109, %p110
      %p112 = scmp.ne.s32.totalorder %s100, %s101
      %p113 = scmp.eq.s32.totalorder %s28, 1
      %p114 = por %p112, %p113
      %p116 = scmp.ne.s32.totalorder %s101, %s115
      %p117 = scmp.eq.s32.totalorder %s28, 0
      %p118 = por %p116, %p117
      %s119 = ssub.s32 %s22, %s29
      %p120 = scmp.eq.s32.totalorder %s119, 0
      %s122 = sadd.s32 %s121, 1
      %s123 = scalar_select %p120, %s121, %s122
      %p126 = pneg %p120
      %p127 = scmp.eq.s32.totalorder %s22, 1
      %p128 = por %p126, %p127
      %p129 = scmp.ne.s32.totalorder %s121, %s124
      %p130 = scmp.eq.s32.totalorder %s22, 0
      %p131 = por %p129, %p130
      %p132 = scmp.ne.s32.totalorder %s121, %s124
      %p133 = scmp.eq.s32.totalorder %s27, 1
      %p134 = por %p132, %p133
      %p135 = scmp.ne.s32.totalorder %s124, %s125
      %p136 = scmp.eq.s32.totalorder %s27, 0
      %p137 = por %p135, %p136
      %p138 = scmp.ne.s32.totalorder %s124, %s125
      %p139 = scmp.eq.s32.totalorder %s28, 1
      %p140 = por %p138, %p139
      %p142 = scmp.ne.s32.totalorder %s125, %s141
      %p143 = scmp.eq.s32.totalorder %s28, 0
      %p144 = por %p142, %p143
      %s145 = ssub.s32 %s22, %s29
      %p146 = scmp.eq.s32.totalorder %s145, 0
      %s148 = sadd.s32 %s147, 1
      %s149 = scalar_select %p146, %s147, %s148
      %p152 = pneg %p146
      %p153 = scmp.eq.s32.totalorder %s22, 1
      %p154 = por %p152, %p153
      %p155 = scmp.ne.s32.totalorder %s147, %s150
      %p156 = scmp.eq.s32.totalorder %s22, 0
      %p157 = por %p155, %p156
      %p158 = scmp.ne.s32.totalorder %s147, %s150
      %p159 = scmp.eq.s32.totalorder %s27, 1
      %p160 = por %p158, %p159
      %p161 = scmp.ne.s32.totalorder %s150, %s151
      %p162 = scmp.eq.s32.totalorder %s27, 0
      %p163 = por %p161, %p162
      %p164 = scmp.ne.s32.totalorder %s150, %s151
      %p165 = scmp.eq.s32.totalorder %s28, 1
      %p166 = por %p164, %p165
      %p168 = scmp.ne.s32.totalorder %s151, %s167
      %p169 = scmp.eq.s32.totalorder %s28, 0
      %p170 = por %p168, %p169
      %p171 = scmp.le.s32.totalorder 1, %s22
      %p172 = scmp.lt.s32.totalorder %s22, 3
      %p173 = pnand %p171, %p172
      %p174 = pneg %p173
      // Predicated region
      $region9: #{tpu_custom_call.1} parent=5 // pred_check
        _
      $region10: #{tpu_custom_call.1} parent=5 // pred_check_branch
        %176 = sbr.rel (%p173) target = $region12
      $region11: #{tpu_custom_call.1} parent=5 // pred_region
        %s177 = ssub.s32 %s22, 1
        // Predicated region
        $region13: #{tpu_custom_call.1} parent=11 // pred_check
          %p178 = pneg %p69
        $region14: #{tpu_custom_call.1} parent=11 // pred_check_branch
          %180 = sbr.rel (%p178) target = $region16
        $region15: #{tpu_custom_call.1} parent=11 // pred_region
          %s182 = ssub.s32 256, 256
          %183 = vsyncadd [#allocation6], %s182
          %s184 = sshll.u32 [#allocation5], 4
          %s185 = int_to_ptr.vmem [resolvable:$true] %s184
          %190 = dma.hbm_to_vmem [thread:$0]  %s1, 256, %s185, [#allocation6], 128, 128, 8
        $region16: #{tpu_custom_call.1} parent=11 // pred_fallthru
          _
        // Predicated region
        $region17: #{tpu_custom_call.1} parent=11 // pred_check
          %p191 = pneg %p90
        $region18: #{tpu_custom_call.1} parent=11 // pred_check_branch
          %193 = sbr.rel (%p191) target = $region20
        $region19: #{tpu_custom_call.1} parent=11 // pred_region
          %s195 = ssub.s32 512, 512
          %196 = vsyncadd [#allocation6], %s195
          %s197 = sshll.u32 [#allocation7], 4
          %s198 = int_to_ptr.vmem [resolvable:$true] %s197
          %203 = dma.hbm_to_vmem [thread:$0]  %s2, 512, %s198, [#allocation6], 128, 128, 8
        $region20: #{tpu_custom_call.1} parent=11 // pred_fallthru
          _
        // Predicated region
        $region21: #{tpu_custom_call.1} parent=11 // pred_check
          %p204 = pneg %p111
        $region22: #{tpu_custom_call.1} parent=11 // pred_check_branch
          %206 = sbr.rel (%p204) target = $region24
        $region23: #{tpu_custom_call.1} parent=11 // pred_region
          _
        $region24: #{tpu_custom_call.1} parent=11 // pred_fallthru
          _
      $region12: #{tpu_custom_call.1} parent=5 // pred_fallthru
        _
      %p207 = scmp.lt.s32.totalorder %s22, 2
      // Predicated region
      $region25: #{tpu_custom_call.1} parent=5 // pred_check
        %p208 = pneg %p207
      $region26: #{tpu_custom_call.1} parent=5 // pred_check_branch
        %210 = sbr.rel (%p208) target = $region28
      $region27: #{tpu_custom_call.1} parent=5 // pred_region
        // Predicated region
        $region29: #{tpu_custom_call.1} parent=27 // pred_check
          %p211 = pneg %p42
        $region30: #{tpu_custom_call.1} parent=27 // pred_check_branch
          %213 = sbr.rel (%p211) target = $region32
        $region31: #{tpu_custom_call.1} parent=27 // pred_region
          %s214 = sand.u32 %s32, 1
          %s215 = scalar_lea.sflag [#allocation3], %s214
          %s216 = sand.u32 %s32, 1
          %s217 = smul.addr %s216, 16
          %s218 = scalar_lea.vmem [#allocation2], %s217
          %s220 = ssub.s32 256, 256
          %221 = vsyncadd %s215, %s220
          %s222 = smul.addr %s22, 2
          %s223 = smul.addr %s222, 128
          %s224 = scalar_lea.hbm %s0, %s223
          %s225 = sshll.u32 %s218, 4
          %s226 = int_to_ptr.vmem [resolvable:$true] %s225
          %231 = dma.hbm_to_vmem [thread:$0]  %s224, 256, %s226, %s215, 128, 128, 8
        $region32: #{tpu_custom_call.1} parent=27 // pred_fallthru
          _
      $region28: #{tpu_custom_call.1} parent=5 // pred_fallthru
        _
      %p232 = scmp.le.s32.totalorder 1, %s22
      %p233 = scmp.lt.s32.totalorder %s22, 3
      %p234 = pnand %p232, %p233
      %p235 = pneg %p234
      // Predicated region
      $region33: #{tpu_custom_call.1} parent=5 // pred_check
        _
      $region34: #{tpu_custom_call.1} parent=5 // pred_check_branch
        %237 = sbr.rel (%p234) target = $region36
      $region35: #{tpu_custom_call.1} parent=5 // pred_region
        %s238 = ssub.s32 %s22, 1
        %s239 = sand.u32 %s35, 1
        %s240 = scalar_lea.sflag [#allocation3], %s239
        %s241 = sand.u32 %s35, 1
        %s242 = smul.addr %s241, 16
        %s243 = scalar_lea.vmem [#allocation2], %s242
        // Predicated region
        $region37: #{tpu_custom_call.1} parent=35 // pred_check
          %p244 = pneg %p48
        $region38: #{tpu_custom_call.1} parent=35 // pred_check_branch
          %246 = sbr.rel (%p244) target = $region40
        $region39: #{tpu_custom_call.1} parent=35 // pred_region
          %247 = dma.done %s240, 256
        $region40: #{tpu_custom_call.1} parent=35 // pred_fallthru
          _
        // Predicated region
        $region41: #{tpu_custom_call.1} parent=35 // pred_check
          %p248 = pneg %p69
        $region42: #{tpu_custom_call.1} parent=35 // pred_check_branch
          %250 = sbr.rel (%p248) target = $region44
        $region43: #{tpu_custom_call.1} parent=35 // pred_region
          %251 = dma.done [#allocation6], 256
        $region44: #{tpu_custom_call.1} parent=35 // pred_fallthru
          _
        // Predicated region
        $region45: #{tpu_custom_call.1} parent=35 // pred_check
          %p252 = pneg %p90
        $region46: #{tpu_custom_call.1} parent=35 // pred_check_branch
          %254 = sbr.rel (%p252) target = $region48
        $region47: #{tpu_custom_call.1} parent=35 // pred_region
          %255 = dma.done [#allocation6], 512
        $region48: #{tpu_custom_call.1} parent=35 // pred_fallthru
          _
        %s256 = sand.u32 %s35, 1
        %s257 = scalar_lea.sflag [#allocation3], %s256
        %s258 = sand.u32 %s35, 1
        %s259 = smul.addr %s258, 16
        %s260 = scalar_lea.vmem [#allocation2], %s259
        %p261 = pneg %p48
        %p262 = pneg %p45
        %p263 = pneg %p69
        %p264 = pneg %p66
        %p265 = pneg %p90
        %p266 = pneg %p87
        %p267 = pneg %p111
        %p268 = pneg %p108
        %p269 = pneg %p137
        %p270 = pneg %p134
        %s271 = sand.u32 %s124, 1
        %s272 = scalar_lea.sflag [#allocation4], %s271
        %s273 = sand.u32 %s124, 1
        %s274 = smul.addr %s273, 8
        %s275 = scalar_lea.vmem [#allocation8], %s274
        %p276 = pneg %p163
        %p277 = pneg %p160
        %s278 = sand.u32 %s150, 1
        %s279 = scalar_lea.sflag [#allocation10], %s278
        %s280 = sand.u32 %s150, 1
        %s281 = smul.addr %s280, 8
        %s282 = scalar_lea.vmem [#allocation9], %s281
        %v283 = vld [vmem:[%s243] sm:$0xff]
        %v284 = vld [vmem:[%s243 + $0x8] sm:$0xff]
        %v285 = vld [vmem:[#allocation7] sm:$0xff]
        %v286 = vld [vmem:[#allocation7 + $0x8] sm:$0xff]
        %v287 = vld [vmem:[#allocation7 + $0x10] sm:$0xff]
        %v288 = vld [vmem:[#allocation7 + $0x18] sm:$0xff]
        %vm289 = vcmask 261120
        %v291 = vsel %vm289, %v283, 0
        %v294 = vsel %vm289, %v284, 0
        %v297 = vsel %vm289, %v285, 0
        %v300 = vsel %vm289, %v286, 0
        %v303 = vsel %vm289, %v287, 0
        %v306 = vsel %vm289, %v288, 0
        %308 = vmatprep.subr.mxu0 0.0
        %309 = vmatpush1.xpose.msra.mxu0 %v297
        %310 = vmatprep.subr.mxu0 0.0
        %311 = vmatpush1.xpose.msra.mxu0 %v300
        %312 = vmatprep.subr.mxu0 0.0
        %313 = vmatpush1.xpose.msra.mxu0 %v303
        %314 = vmatprep.subr.mxu0 0.0
        %315 = vmatpush1.xpose.msra.mxu0 %v306
        %316 = vmatprep.subr.mxu0 0.0
        %317 = vmatpush1.xpose.msra.mxu0 0.0
        %318 = vmatprep.subr.mxu0 0.0
        %319 = vmatpush1.xpose.msra.mxu0 0.0
        %320 = vmatprep.subr.mxu0 0.0
        %321 = vmatpush1.xpose.msra.mxu0 0.0
        %322 = vmatprep.subr.mxu0 0.0
        %323 = vmatpush1.xpose.msra.mxu0 0.0
        %324 = vmatprep.subr.mxu0 0.0
        %325 = vmatpush1.xpose.msra.mxu0 0.0
        %326 = vmatprep.subr.mxu0 0.0
        %327 = vmatpush1.xpose.msra.mxu0 0.0
        %328 = vmatprep.subr.mxu0 0.0
        %329 = vmatpush1.xpose.msra.mxu0 0.0
        %330 = vmatprep.subr.mxu0 0.0
        %331 = vmatpush1.xpose.msra.mxu0 0.0
        %332 = vmatprep.subr.mxu0 0.0
        %333 = vmatpush1.xpose.msra.mxu0 0.0
        %334 = vmatprep.subr.mxu0 0.0
        %335 = vmatpush1.xpose.msra.mxu0 0.0
        %336 = vmatprep.subr.mxu0 0.0
        %337 = vmatpush1.xpose.msra.mxu0 0.0
        %338 = vmatprep.subr.mxu0 0.0
        %339 = vmatpush1.xpose.msra.mxu0 0.0
        %340 = vmatprep.subr.mxu0 0.0
        %341 = vmatpush1.xpose.msra.mxu0 0.0
        %342 = vmatprep.subr.mxu0 0.0
        %343 = vmatpush1.xpose.msra.mxu0 0.0
        %344 = vmatprep.subr.mxu0 0.0
        %345 = vmatpush1.xpose.msra.mxu0 0.0
        %346 = vmatprep.subr.mxu0 0.0
        %347 = vmatpush1.xpose.msra.mxu0 0.0
        %348 = vmatprep.subr.mxu0 0.0
        %349 = vmatpush1.xpose.msra.mxu0 0.0
        %350 = vmatprep.subr.mxu0 0.0
        %351 = vmatpush1.xpose.msra.mxu0 0.0
        %352 = vmatprep.subr.mxu0 0.0
        %353 = vmatpush1.xpose.msra.mxu0 0.0
        %354 = vmatprep.subr.mxu0 0.0
        %355 = vmatpush1.xpose.msra.mxu0 0.0
        %356 = vmatprep.subr.mxu0 0.0
        %357 = vmatpush1.xpose.msra.mxu0 0.0
        %358 = vmatprep.subr.mxu0 0.0
        %359 = vmatpush1.xpose.msra.mxu0 0.0
        %360 = vmatprep.subr.mxu0 0.0
        %361 = vmatpush1.xpose.msra.mxu0 0.0
        %362 = vmatprep.subr.mxu0 0.0
        %363 = vmatpush1.xpose.msra.mxu0 0.0
        %364 = vmatprep.subr.mxu0 0.0
        %365 = vmatpush1.xpose.msra.mxu0 0.0
        %366 = vmatprep.subr.mxu0 0.0
        %367 = vmatpush1.xpose.msra.mxu0 0.0
        %368 = vmatprep.subr.mxu0 0.0
        %369 = vmatpush1.xpose.msra.mxu0 0.0
        %370 = vmatprep.subr.mxu0 0.0
        %371 = vmatpush1.xpose.msra.mxu0 0.0
        %372 = vmatprep.mubr.f32.mxu0 0.0
        %373 = vmatmul.mubr.f32.gmra.mrb[0].mxu0 %v291
        %v374 = vpop.f32.mrb[0].mxu0
        %v375 = vadd.f32 0.0, %v374
        %v376 = vpop.f32.mrb[0].mxu0
        %377 = vmatprep.mubr.f32.mxu0 0.0
        %378 = vmatmul.mubr.f32.gmra.mrb[0].mxu0 %v294
        %v379 = vpop.f32.mrb[0].mxu0
        %v380 = vadd.f32 0.0, %v379
        %v381 = vpop.f32.mrb[0].mxu0
        %382 = vdwg.mxu0
        %v383 = vld [vmem:[#allocation5] sm:$0xff]
        %v384 = vld [vmem:[#allocation5 + $0x8] sm:$0xff]
        %v385 = vadd.f32 %v375, %v383
        %v386 = vadd.f32 %v380, %v384
        %v387 = vtanh.pop %v385
        %v388 = vtanh.pop %v386
        %v389 = vld [vmem:[%s3] sm:$0xff]
        %v391 = vsel %vm289, %v387, 0
        %v394 = vsel %vm289, %v388, 0
        %v397 = vsel %vm289, %v389, 0
        %399 = vmatprep.subr.mxu0 0.0
        %400 = vmatpush1.xpose.msra.mxu0 %v397
        %401 = vmatprep.subr.mxu0 0.0
        %402 = vmatpush1.xpose.msra.mxu0 0.0
        %403 = vmatprep.subr.mxu0 0.0
        %404 = vmatpush1.xpose.msra.mxu0 0.0
        %405 = vmatprep.subr.mxu0 0.0
        %406 = vmatpush1.xpose.msra.mxu0 0.0
        %407 = vmatprep.subr.mxu0 0.0
        %408 = vmatpush1.xpose.msra.mxu0 0.0
        %409 = vmatprep.subr.mxu0 0.0
        %410 = vmatpush1.xpose.msra.mxu0 0.0
        %411 = vmatprep.subr.mxu0 0.0
        %412 = vmatpush1.xpose.msra.mxu0 0.0
        %413 = vmatprep.subr.mxu0 0.0
        %414 = vmatpush1.xpose.msra.mxu0 0.0
        %415 = vmatprep.subr.mxu0 0.0
        %416 = vmatpush1.xpose.msra.mxu0 0.0
        %417 = vmatprep.subr.mxu0 0.0
        %418 = vmatpush1.xpose.msra.mxu0 0.0
        %419 = vmatprep.subr.mxu0 0.0
        %420 = vmatpush1.xpose.msra.mxu0 0.0
        %421 = vmatprep.subr.mxu0 0.0
        %422 = vmatpush1.xpose.msra.mxu0 0.0
        %423 = vmatprep.subr.mxu0 0.0
        %424 = vmatpush1.xpose.msra.mxu0 0.0
        %425 = vmatprep.subr.mxu0 0.0
        %426 = vmatpush1.xpose.msra.mxu0 0.0
        %427 = vmatprep.subr.mxu0 0.0
        %428 = vmatpush1.xpose.msra.mxu0 0.0
        %429 = vmatprep.subr.mxu0 0.0
        %430 = vmatpush1.xpose.msra.mxu0 0.0
        %431 = vmatprep.subr.mxu0 0.0
        %432 = vmatpush1.xpose.msra.mxu0 0.0
        %433 = vmatprep.subr.mxu0 0.0
        %434 = vmatpush1.xpose.msra.mxu0 0.0
        %435 = vmatprep.subr.mxu0 0.0
        %436 = vmatpush1.xpose.msra.mxu0 0.0
        %437 = vmatprep.subr.mxu0 0.0
        %438 = vmatpush1.xpose.msra.mxu0 0.0
        %439 = vmatprep.subr.mxu0 0.0
        %440 = vmatpush1.xpose.msra.mxu0 0.0
        %441 = vmatprep.subr.mxu0 0.0
        %442 = vmatpush1.xpose.msra.mxu0 0.0
        %443 = vmatprep.subr.mxu0 0.0
        %444 = vmatpush1.xpose.msra.mxu0 0.0
        %445 = vmatprep.subr.mxu0 0.0
        %446 = vmatpush1.xpose.msra.mxu0 0.0
        %447 = vmatprep.subr.mxu0 0.0
        %448 = vmatpush1.xpose.msra.mxu0 0.0
        %449 = vmatprep.subr.mxu0 0.0
        %450 = vmatpush1.xpose.msra.mxu0 0.0
        %451 = vmatprep.subr.mxu0 0.0
        %452 = vmatpush1.xpose.msra.mxu0 0.0
        %453 = vmatprep.subr.mxu0 0.0
        %454 = vmatpush1.xpose.msra.mxu0 0.0
        %455 = vmatprep.subr.mxu0 0.0
        %456 = vmatpush1.xpose.msra.mxu0 0.0
        %457 = vmatprep.subr.mxu0 0.0
        %458 = vmatpush1.xpose.msra.mxu0 0.0
        %459 = vmatprep.subr.mxu0 0.0
        %460 = vmatpush1.xpose.msra.mxu0 0.0
        %461 = vmatprep.subr.mxu0 0.0
        %462 = vmatpush1.xpose.msra.mxu0 0.0
        %463 = vmatprep.mubr.f32.mxu0 0.0
        %464 = vmatmul.mubr.f32.gmra.mrb[0].mxu0 %v391
        %v465 = vpop.f32.mrb[0].mxu0
        %v466 = vadd.f32 0.0, %v465
        %v467 = vpop.f32.mrb[0].mxu0
        %468 = vmatprep.mubr.f32.mxu0 0.0
        %469 = vmatmul.mubr.f32.gmra.mrb[0].mxu0 %v394
        %v470 = vpop.f32.mrb[0].mxu0
        %v471 = vadd.f32 0.0, %v470
        %v472 = vpop.f32.mrb[0].mxu0
        %473 = vdwg.mxu0
        %474 = vxpose.xlu0.b32.start [1/16] %v466, 128
        %475 = vxpose.xlu0.b32.cont [2/16] %v471, 128
        %476 = vxpose.xlu0.b32.cont [3/16] 0.0, 128
        %477 = vxpose.xlu0.b32.cont [4/16] 0.0, 128
        %478 = vxpose.xlu0.b32.cont [5/16] 0.0, 128
        %479 = vxpose.xlu0.b32.cont [6/16] 0.0, 128
        %480 = vxpose.xlu0.b32.cont [7/16] 0.0, 128
        %481 = vxpose.xlu0.b32.cont [8/16] 0.0, 128
        %482 = vxpose.xlu0.b32.cont [9/16] 0.0, 128
        %483 = vxpose.xlu0.b32.cont [10/16] 0.0, 128
        %484 = vxpose.xlu0.b32.cont [11/16] 0.0, 128
        %485 = vxpose.xlu0.b32.cont [12/16] 0.0, 128
        %486 = vxpose.xlu0.b32.cont [13/16] 0.0, 128
        %487 = vxpose.xlu0.b32.cont [14/16] 0.0, 128
        %488 = vxpose.xlu0.b32.cont [15/16] 0.0, 128
        %489 = vxpose.xlu0.b32.end [16/16] 0.0, 128
        %v490 = vpop.trf.xlu0
        %v491 = vpop.trf.xlu0
        %v492 = vpop.trf.xlu0
        %v493 = vpop.trf.xlu0
        %v494 = vpop.trf.xlu0
        %v495 = vpop.trf.xlu0
        %v496 = vpop.trf.xlu0
        %v497 = vpop.trf.xlu0
        %v498 = vpop.trf.xlu0
        %v499 = vpop.trf.xlu0
        %v500 = vpop.trf.xlu0
        %v501 = vpop.trf.xlu0
        %v502 = vpop.trf.xlu0
        %v503 = vpop.trf.xlu0
        %v504 = vpop.trf.xlu0
        %v505 = vpop.trf.xlu0
        %vm506 = vcmask 130048
        %v507 = vsel %vm506, %v490, -inf
        %508 = vmax.xlane.f32.xlu0 %v507
        %v509 = vpop.xlane.xlu0 %508
        %v510 = vsub.f32 %v490, %v509
        %v511 = vmul.f32 %v510, 1.442695
        %v512 = vpow.pop %v511
        %v513 = vsel %vm506, %v512, 0.0
        %514 = vadd.xlane.f32.xlu0 %v513
        %v515 = vpop.xlane.xlu0 %514
        %v516 = vrcp.pop %v515
        %v517 = vmul.f32 %v512, %v516
        %518 = vst.msk [vmem:[%s282] sm:$0xff] %vm506, %v517
        %v520 = vsel %vm506, %v517, 0
        %522 = vmatprep.subr.mxu0 0.0
        %523 = vmatpush1.msra.mxu0 %v283
        %524 = vmatprep.subr.mxu0 0.0
        %525 = vmatpush1.msra.mxu0 %v284
        %526 = vmatprep.subr.mxu0 0.0
        %527 = vmatpush1.msra.mxu0 0.0
        %528 = vmatprep.subr.mxu0 0.0
        %529 = vmatpush1.msra.mxu0 0.0
        %530 = vmatprep.subr.mxu0 0.0
        %531 = vmatpush1.msra.mxu0 0.0
        %532 = vmatprep.subr.mxu0 0.0
        %533 = vmatpush1.msra.mxu0 0.0
        %534 = vmatprep.subr.mxu0 0.0
        %535 = vmatpush1.msra.mxu0 0.0
        %536 = vmatprep.subr.mxu0 0.0
        %537 = vmatpush1.msra.mxu0 0.0
        %538 = vmatprep.subr.mxu0 0.0
        %539 = vmatpush1.msra.mxu0 0.0
        %540 = vmatprep.subr.mxu0 0.0
        %541 = vmatpush1.msra.mxu0 0.0
        %542 = vmatprep.subr.mxu0 0.0
        %543 = vmatpush1.msra.mxu0 0.0
        %544 = vmatprep.subr.mxu0 0.0
        %545 = vmatpush1.msra.mxu0 0.0
        %546 = vmatprep.subr.mxu0 0.0
        %547 = vmatpush1.msra.mxu0 0.0
        %548 = vmatprep.subr.mxu0 0.0
        %549 = vmatpush1.msra.mxu0 0.0
        %550 = vmatprep.subr.mxu0 0.0
        %551 = vmatpush1.msra.mxu0 0.0
        %552 = vmatprep.subr.mxu0 0.0
        %553 = vmatpush1.msra.mxu0 0.0
        %554 = vmatprep.subr.mxu0 0.0
        %555 = vmatpush1.msra.mxu0 0.0
        %556 = vmatprep.subr.mxu0 0.0
        %557 = vmatpush1.msra.mxu0 0.0
        %558 = vmatprep.subr.mxu0 0.0
        %559 = vmatpush1.msra.mxu0 0.0
        %560 = vmatprep.subr.mxu0 0.0
        %561 = vmatpush1.msra.mxu0 0.0
        %562 = vmatprep.subr.mxu0 0.0
        %563 = vmatpush1.msra.mxu0 0.0
        %564 = vmatprep.subr.mxu0 0.0
        %565 = vmatpush1.msra.mxu0 0.0
        %566 = vmatprep.subr.mxu0 0.0
        %567 = vmatpush1.msra.mxu0 0.0
        %568 = vmatprep.subr.mxu0 0.0
        %569 = vmatpush1.msra.mxu0 0.0
        %570 = vmatprep.subr.mxu0 0.0
        %571 = vmatpush1.msra.mxu0 0.0
        %572 = vmatprep.subr.mxu0 0.0
        %573 = vmatpush1.msra.mxu0 0.0
        %574 = vmatprep.subr.mxu0 0.0
        %575 = vmatpush1.msra.mxu0 0.0
        %576 = vmatprep.subr.mxu0 0.0
        %577 = vmatpush1.msra.mxu0 0.0
        %578 = vmatprep.subr.mxu0 0.0
        %579 = vmatpush1.msra.mxu0 0.0
        %580 = vmatprep.subr.mxu0 0.0
        %581 = vmatpush1.msra.mxu0 0.0
        %582 = vmatprep.subr.mxu0 0.0
        %583 = vmatpush1.msra.mxu0 0.0
        %584 = vmatprep.subr.mxu0 0.0
        %585 = vmatpush1.msra.mxu0 0.0
        %586 = vmatprep.mubr.f32.mxu0 0.0
        %587 = vmatmul.mubr.f32.gmra.mrb[0].mxu0 %v520
        %v588 = vpop.f32.mrb[0].mxu0
        %v589 = vadd.f32 0.0, %v588
        %v590 = vpop.f32.mrb[0].mxu0
        %591 = vdwg.mxu0
        %592 = vst.msk [vmem:[%s275] sm:$0xff] %vm289, %v589
        %s593 = sand.u32 %s124, 1
        %s594 = scalar_lea.sflag [#allocation4], %s593
        %s595 = sand.u32 %s124, 1
        %s596 = smul.addr %s595, 8
        %s597 = scalar_lea.vmem [#allocation8], %s596
        %s598 = sand.u32 %s150, 1
        %s599 = scalar_lea.sflag [#allocation10], %s598
        %s600 = sand.u32 %s150, 1
        %s601 = smul.addr %s600, 8
        %s602 = scalar_lea.vmem [#allocation9], %s601
        // Predicated region
        $region49: #{tpu_custom_call.1} parent=35 // pred_check
          %p603 = pneg %p134
        $region50: #{tpu_custom_call.1} parent=35 // pred_check_branch
          %605 = sbr.rel (%p603) target = $region52
        $region51: #{tpu_custom_call.1} parent=35 // pred_region
          %s607 = ssub.s32 128, 128
          %608 = vsyncadd %s594, %s607
          %s609 = smul.addr %s27, 128
          %s610 = scalar_lea.hbm %s4, %s609
          %s612 = sshll.u32 %s597, 4
          %s613 = int_to_ptr.vmem [resolvable:$true] %s612
          %615 = dma.vmem_to_hbm [thread:$0]  %s613, 128, %s610, %s594
        $region52: #{tpu_custom_call.1} parent=35 // pred_fallthru
          _
        // Predicated region
        $region53: #{tpu_custom_call.1} parent=35 // pred_check
          %p616 = pneg %p160
        $region54: #{tpu_custom_call.1} parent=35 // pred_check_branch
          %618 = sbr.rel (%p616) target = $region56
        $region55: #{tpu_custom_call.1} parent=35 // pred_region
          %s620 = ssub.s32 128, 128
          %621 = vsyncadd %s599, %s620
          %s622 = smul.addr %s27, 128
          %s623 = scalar_lea.hbm %s5, %s622
          %s625 = sshll.u32 %s602, 4
          %s626 = int_to_ptr.vmem [resolvable:$true] %s625
          %628 = dma.vmem_to_hbm [thread:$0]  %s626, 128, %s623, %s599
        $region56: #{tpu_custom_call.1} parent=35 // pred_fallthru
          _
      $region36: #{tpu_custom_call.1} parent=5 // pred_fallthru
        _
      %p629 = scmp.le.s32.totalorder 2, %s22
      // Predicated region
      $region57: #{tpu_custom_call.1} parent=5 // pred_check
        %p630 = pneg %p629
      $region58: #{tpu_custom_call.1} parent=5 // pred_check_branch
        %632 = sbr.rel (%p630) target = $region60
      $region59: #{tpu_custom_call.1} parent=5 // pred_region
        %s633 = ssub.s32 %s22, 2
        // Predicated region
        $region61: #{tpu_custom_call.1} parent=59 // pred_check
          %p634 = pneg %p140
        $region62: #{tpu_custom_call.1} parent=59 // pred_check_branch
          %636 = sbr.rel (%p634) target = $region64
        $region63: #{tpu_custom_call.1} parent=59 // pred_region
          %s637 = sand.u32 %s125, 1
          %s638 = scalar_lea.sflag [#allocation4], %s637
          %s639 = sand.u32 %s125, 1
          %s640 = smul.addr %s639, 8
          %s641 = scalar_lea.vmem [#allocation8], %s640
          %642 = dma.done %s638, 128
        $region64: #{tpu_custom_call.1} parent=59 // pred_fallthru
          _
        // Predicated region
        $region65: #{tpu_custom_call.1} parent=59 // pred_check
          %p643 = pneg %p166
        $region66: #{tpu_custom_call.1} parent=59 // pred_check_branch
          %645 = sbr.rel (%p643) target = $region68
        $region67: #{tpu_custom_call.1} parent=59 // pred_region
          %s646 = sand.u32 %s151, 1
          %s647 = scalar_lea.sflag [#allocation10], %s646
          %s648 = sand.u32 %s151, 1
          %s649 = smul.addr %s648, 8
          %s650 = scalar_lea.vmem [#allocation9], %s649
          %651 = dma.done %s647, 128
        $region68: #{tpu_custom_call.1} parent=59 // pred_fallthru
          _
      $region60: #{tpu_custom_call.1} parent=5 // pred_fallthru
        _
    $region6: #{tpu_custom_call.1} parent=1 // loop_footer
      %s26 = sadd.s32 1, %s22
    $region7: #{tpu_custom_call.1} parent=1 // loop_footer_branch
      %21 = sbr.rel target = $region3
    $region8: #{tpu_custom_call.1} parent=1 // loop_exit
      _
    %652 = vsyncpa [#allocation3], 1
    %s653 = scalar_lea.sflag [#allocation3], 1
    %654 = vsyncpa %s653, 1
    %655 = vsyncpa [#allocation6], 1
    %656 = vsyncpa [#allocation4], 1
    %s657 = scalar_lea.sflag [#allocation4], 1
    %658 = vsyncpa %s657, 1
    %659 = vsyncpa [#allocation10], 1
    %s660 = scalar_lea.sflag [#allocation10], 1
    %661 = vsyncpa %s660, 1

</llo_original>
